<compile_context>
chip_gen: v5e
topology: v5e:2x2
jax: 0.10.0
libtpu: 0.0.40
codegen_flags: <defaults>
</compile_context>

<pallas_src>
import functools

import jax
import jax.numpy as jnp
from jax import lax
from jax.experimental import pallas as pl
from jax.experimental.pallas import tpu as pltpu


_TARGET_BLOCK_BYTES = 2 << 20          # ~2 MiB blocks: ~85%+ of HBM roofline, VMEM-safe on v7x
_VMEM_LIMIT_BYTES = 32 * 1024 * 1024   # conservative scoped-VMEM cap (v7x has 64 MiB total)
_MIN_PARALLEL_STEPS = 4                # keep both v7x TensorCores fed


# --------------------------------------------------------------------------
# Kernels
# --------------------------------------------------------------------------
def _layernorm_nct_kernel(x_ref, g_ref, b_ref, o_ref, *, eps):
    # x_ref: (1, C, tile_T); g_ref / b_ref: (1, C, 1) broadcast over lanes.
    # Reduction runs over the channel (sublane) axis; everything is lane-wise,
    # so garbage lanes from a masked partial block cannot leak into valid lanes.
    x = x_ref[...].astype(jnp.float32)
    mean = jnp.mean(x, axis=1, keepdims=True)
    centered = x - mean
    var = jnp.mean(centered * centered, axis=1, keepdims=True)
    inv = lax.rsqrt(var + eps)
    y = centered * inv
    y = y * g_ref[...].astype(jnp.float32) + b_ref[...].astype(jnp.float32)
    o_ref[...] = y.astype(o_ref.dtype)


def _layernorm_nc_kernel(x_ref, g_ref, b_ref, o_ref, *, eps):
    # x_ref: (tile_B, C); g_ref / b_ref: (1, C). Reduction over the lane (C) axis.
    x = x_ref[...].astype(jnp.float32)
    mean = jnp.mean(x, axis=-1, keepdims=True)
    centered = x - mean
    var = jnp.mean(centered * centered, axis=-1, keepdims=True)
    inv = lax.rsqrt(var + eps)
    y = centered * inv
    y = y * g_ref[...].astype(jnp.float32) + b_ref[...].astype(jnp.float32)
    o_ref[...] = y.astype(o_ref.dtype)


# --------------------------------------------------------------------------
# Wrappers
# --------------------------------------------------------------------------
def _layer_norm_nct(x, gamma, beta, eps):
    """x: [B, C, T]; normalize over C in the native layout."""
    B, C, T = x.shape
    itemsize = jnp.dtype(x.dtype).itemsize

    # Largest lane-dense (multiple-of-128) T tile that keeps one (C, tile_T)
    # block around the target size -- sized from the real input dtype.
    max_lanes = max(128, (_TARGET_BLOCK_BYTES // max(C * itemsize, 1)) // 128 * 128)
    t_rounded = pl.cdiv(T, 128) * 128
    tile_T = min(t_rounded, max_lanes)

    # v7x: make sure the parallel grid has enough steps for both TensorCores.
    while B * pl.cdiv(T, tile_T) < _MIN_PARALLEL_STEPS and tile_T > 128:
        tile_T = max(128, (tile_T // 2) // 128 * 128)

    if tile_T >= T:
        # Single full-T block per batch row: block dims == array dims, so the
        # (8,128) divisibility rule does not apply and no masking is needed.
        tile_T = T
    grid = (B, pl.cdiv(T, tile_T))

    g3 = gamma.reshape(1, C, 1)
    b3 = beta.reshape(1, C, 1)
    kernel = functools.partial(_layernorm_nct_kernel, eps=float(eps))

    return pl.pallas_call(
        kernel,
        out_shape=jax.ShapeDtypeStruct((B, C, T), x.dtype),
        grid_spec=pltpu.PrefetchScalarGridSpec(
            num_scalar_prefetch=0,
            grid=grid,
            in_specs=[
                # NOTE: if a profile ever shows exposed DMA (tiny C), add
                # pipeline_mode=pl.Buffered(3) here for deeper input buffering.
                pl.BlockSpec((1, C, tile_T), lambda b, t: (b, 0, t)),
                pl.BlockSpec((1, C, 1), lambda b, t: (0, 0, 0)),
                pl.BlockSpec((1, C, 1), lambda b, t: (0, 0, 0)),
            ],
            out_specs=pl.BlockSpec((1, C, tile_T), lambda b, t: (b, 0, t)),
        ),
        compiler_params=pltpu.CompilerParams(
            dimension_semantics=("parallel", "parallel"),
            vmem_limit_bytes=_VMEM_LIMIT_BYTES,
        ),
    )(x, g3, b3)


def _layer_norm_nc(x, gamma, beta, eps):
    """x: [B, C]; normalize over C (the last / lane axis)."""
    B, C = x.shape
    itemsize = jnp.dtype(x.dtype).itemsize

    max_rows = max(8, (_TARGET_BLOCK_BYTES // max(C * itemsize, 1)) // 8 * 8)
    b_rounded = pl.cdiv(B, 8) * 8
    tile_B = min(b_rounded, max_rows)

    while pl.cdiv(B, tile_B) < _MIN_PARALLEL_STEPS and tile_B > 8:
        tile_B = max(8, (tile_B // 2) // 8 * 8)

    if tile_B >= B:
        tile_B = B  # full block; no masking needed
    grid = (pl.cdiv(B, tile_B),)

    g2 = gamma.reshape(1, C)
    b2 = beta.reshape(1, C)
    kernel = functools.partial(_layernorm_nc_kernel, eps=float(eps))

    return pl.pallas_call(
        kernel,
        out_shape=jax.ShapeDtypeStruct((B, C), x.dtype),
        grid_spec=pltpu.PrefetchScalarGridSpec(
            num_scalar_prefetch=0,
            grid=grid,
            in_specs=[
                pl.BlockSpec((tile_B, C), lambda i: (i, 0)),
                pl.BlockSpec((1, C), lambda i: (0, 0)),
                pl.BlockSpec((1, C), lambda i: (0, 0)),
            ],
            out_specs=pl.BlockSpec((tile_B, C), lambda i: (i, 0)),
        ),
        compiler_params=pltpu.CompilerParams(
            dimension_semantics=("parallel",),
            vmem_limit_bytes=_VMEM_LIMIT_BYTES,
        ),
    )(x, g2, b2)


def layer_norm(x, gamma, beta, eps=1e-5):
    """Kokoro LayerNorm forward: normalize over the channel axis (dim 1).

    Accepts [B, C], [B, C, T], or [B, C, *spatial] (spatial dims are flattened
    into T, which is a view-only reshape, and restored afterwards).
    """
    if x.ndim == 2:
        return _layer_norm_nc(x, gamma, beta, eps)
    if x.ndim == 3:
        return _layer_norm_nct(x, gamma, beta, eps)
    if x.ndim > 3:
        orig_shape = x.shape
        B, C = orig_shape[0], orig_shape[1]
        xf = x.reshape(B, C, -1)  # contiguous merge of trailing dims: no copy
        out = _layer_norm_nct(xf, gamma, beta, eps)
        return out.reshape(orig_shape)
    raise ValueError(f"layer_norm expects rank >= 2 input, got shape {x.shape}")


# --------------------------------------------------------------------------
# Reference + self-test
# --------------------------------------------------------------------------
def _reference(x, gamma, beta, eps=1e-5):
    # Pure-JAX reference matching the PyTorch module (F.layer_norm over channels).
    xt = jnp.swapaxes(x, 1, -1).astype(jnp.float32)
    mean = jnp.mean(xt, axis=-1, keepdims=True)
    var = jnp.mean((xt - mean) ** 2, axis=-1, keepdims=True)
    y = (xt - mean) / jnp.sqrt(var + eps)
    y = y * gamma + beta
    return jnp.swapaxes(y, 1, -1).astype(x.dtype)


if __name__ == "__main__":
    key = jax.random.PRNGKey(0)
    kx, kg, kb = jax.random.split(key, 3)

    B, C, T = 2, 4, 16
    x = jax.random.normal(kx, (B, C, T), dtype=jnp.float32)
    # Module __init__ uses ones / zeros; perturb so the affine path is exercised.
    gamma = jnp.ones((C,), jnp.float32) + 0.1 * jax.random.normal(kg, (C,), jnp.float32)
    beta = 0.1 * jax.random.normal(kb, (C,), jnp.float32)

    # Small-T path: one full (C, T) block per batch row.
    out = jax.block_until_ready(layer_norm(x, gamma, beta))
    assert out.shape == (B, C, T)
    assert jnp.allclose(out, _reference(x, gamma, beta), atol=1e-5, rtol=1e-5)

    # Lane-dense tiled path (T a multiple of 128; grid split for parallelism).
    x2 = jax.random.normal(kx, (B, C, 256), dtype=jnp.float32)
    out2 = jax.block_until_ready(layer_norm(x2, gamma, beta))
    assert jnp.allclose(out2, _reference(x2, gamma, beta), atol=1e-5, rtol=1e-5)

    # Ragged T: cdiv grid with a masked partial last block (no pad / slice passes).
    x3 = jax.random.normal(kx, (B, C, 200), dtype=jnp.float32)
    out3 = jax.block_until_ready(layer_norm(x3, gamma, beta))
    assert jnp.allclose(out3, _reference(x3, gamma, beta), atol=1e-5, rtol=1e-5)

    # Rank-2 [B, C] path: dedicated lane-axis reduction kernel.
    x4 = jax.random.normal(kx, (8, C), dtype=jnp.float32)
    out4 = jax.block_until_ready(layer_norm(x4, gamma, beta))
    assert jnp.allclose(out4, _reference(x4, gamma, beta), atol=1e-5, rtol=1e-5)

    print("KERNEL_OK")
</pallas_src>

<mosaic_0001>
module attributes {stable_mosaic.version = 11 : i64} {
  func.func @_layernorm_nct_kernel(%arg0: i32, %arg1: i32, %arg2: memref<1x4x16xf32, #tpu.memory_space<vmem>>, %arg3: memref<1x4x1xf32, #tpu.memory_space<vmem>>, %arg4: memref<1x4x1xf32, #tpu.memory_space<vmem>>, %arg5: memref<1x4x16xf32, #tpu.memory_space<vmem>>) attributes {dimension_semantics = [#tpu.dimension_semantics<parallel>, #tpu.dimension_semantics<parallel>], iteration_bounds = array<i64: 2, 1>, scalar_prefetch = 0 : i64, scratch_operands = 0 : i64, tpu.core_type = #tpu.core_type<tc>, window_params = [{transform_indices = @transform_0, window_bounds = array<i64: 1, 4, 16>}, {pipeline_mode = #tpu.pipeline_mode<synchronous>, transform_indices = @transform_1, window_bounds = array<i64: 1, 4, 1>}, {pipeline_mode = #tpu.pipeline_mode<synchronous>, transform_indices = @transform_2, window_bounds = array<i64: 1, 4, 1>}, {transform_indices = @transform_3, window_bounds = array<i64: 1, 4, 16>}]} {
    %c0 = arith.constant 0 : index
    %c0_0 = arith.constant 0 : index
    %c0_1 = arith.constant 0 : index
    %0 = vector.load %arg2[%c0, %c0_0, %c0_1] : memref<1x4x16xf32, #tpu.memory_space<vmem>>, vector<1x4x16xf32>
    %cst = arith.constant dense<0.000000e+00> : vector<1x16xf32>
    %1 = vector.multi_reduction <add>, %0, %cst [1] : vector<1x4x16xf32> to vector<1x16xf32>
    %2 = vector.shape_cast %1 : vector<1x16xf32> to vector<1x1x16xf32>
    %cst_2 = arith.constant 4.000000e+00 : f32
    %3 = vector.broadcast %cst_2 : f32 to vector<1x1x16xf32>
    %4 = arith.divf %2, %3 : vector<1x1x16xf32>
    %5 = vector.broadcast %4 : vector<1x1x16xf32> to vector<1x4x16xf32>
    %6 = arith.subf %0, %5 : vector<1x4x16xf32>
    %7 = arith.mulf %6, %6 : vector<1x4x16xf32>
    %cst_3 = arith.constant dense<0.000000e+00> : vector<1x16xf32>
    %8 = vector.multi_reduction <add>, %7, %cst_3 [1] : vector<1x4x16xf32> to vector<1x16xf32>
    %9 = vector.shape_cast %8 : vector<1x16xf32> to vector<1x1x16xf32>
    %cst_4 = arith.constant 4.000000e+00 : f32
    %10 = vector.broadcast %cst_4 : f32 to vector<1x1x16xf32>
    %11 = arith.divf %9, %10 : vector<1x1x16xf32>
    %cst_5 = arith.constant 9.99999974E-6 : f32
    %12 = vector.broadcast %cst_5 : f32 to vector<1x1x16xf32>
    %13 = arith.addf %11, %12 : vector<1x1x16xf32>
    %14 = math.rsqrt %13 : vector<1x1x16xf32>
    %15 = vector.broadcast %14 : vector<1x1x16xf32> to vector<1x4x16xf32>
    %16 = arith.mulf %6, %15 : vector<1x4x16xf32>
    %c0_6 = arith.constant 0 : index
    %c0_7 = arith.constant 0 : index
    %c0_8 = arith.constant 0 : index
    %17 = vector.load %arg3[%c0_6, %c0_7, %c0_8] : memref<1x4x1xf32, #tpu.memory_space<vmem>>, vector<1x4x1xf32>
    %18 = vector.broadcast %17 : vector<1x4x1xf32> to vector<1x4x16xf32>
    %19 = arith.mulf %16, %18 : vector<1x4x16xf32>
    %c0_9 = arith.constant 0 : index
    %c0_10 = arith.constant 0 : index
    %c0_11 = arith.constant 0 : index
    %20 = vector.load %arg4[%c0_9, %c0_10, %c0_11] : memref<1x4x1xf32, #tpu.memory_space<vmem>>, vector<1x4x1xf32>
    %21 = vector.broadcast %20 : vector<1x4x1xf32> to vector<1x4x16xf32>
    %22 = arith.addf %19, %21 : vector<1x4x16xf32>
    %c0_12 = arith.constant 0 : index
    %c0_13 = arith.constant 0 : index
    %c0_14 = arith.constant 0 : index
    %23 = vector.load %arg5[%c0_12, %c0_13, %c0_14] : memref<1x4x16xf32, #tpu.memory_space<vmem>>, vector<1x4x16xf32>
    tpu.vector_store %arg5[%c0_12, %c0_13, %c0_14], %22 {strides = array<i32>} : memref<1x4x16xf32, #tpu.memory_space<vmem>>, vector<1x4x16xf32>,
    return
  }
  func.func @transform_0(%arg0: i32, %arg1: i32) -> (i32, i32, i32) {
    %c0_i32 = arith.constant 0 : i32
    %c0_i32_0 = arith.constant 0 : i32
    return %arg0, %c0_i32, %arg1 : i32, i32, i32
  }
  func.func @transform_1(%arg0: i32, %arg1: i32) -> (i32, i32, i32) {
    %c0_i32 = arith.constant 0 : i32
    %c0_i32_0 = arith.constant 0 : i32
    %c0_i32_1 = arith.constant 0 : i32
    %c0_i32_2 = arith.constant 0 : i32
    return %c0_i32, %c0_i32_0, %c0_i32_1 : i32, i32, i32
  }
  func.func @transform_2(%arg0: i32, %arg1: i32) -> (i32, i32, i32) {
    %c0_i32 = arith.constant 0 : i32
    %c0_i32_0 = arith.constant 0 : i32
    %c0_i32_1 = arith.constant 0 : i32
    %c0_i32_2 = arith.constant 0 : i32
    return %c0_i32, %c0_i32_0, %c0_i32_1 : i32, i32, i32
  }
  func.func @transform_3(%arg0: i32, %arg1: i32) -> (i32, i32, i32) {
    %c0_i32 = arith.constant 0 : i32
    %c0_i32_0 = arith.constant 0 : i32
    return %arg0, %c0_i32, %arg1 : i32, i32, i32
  }
}

</mosaic_0001>

<llo_original>
// kernel: tpu_custom_call.1
$region0: #{tpu_custom_call.1}
  #allocation0 [shape = 'u32[]', space=smem, size = 0x4, offset = 0x4, fixed_abs, tag = 'smem constant byte address 0x4 - core index']
  #allocation1 [shape = 'u32[72,128]{1,0:T(1,128)}', space=vmem, size = 0x9000, scoped, tag = 'internal scratch']
  %s0 = inlined_call_operand.vmem [shape: f32[2,4,16], index: 0, kind: input, shape index: {}]
  %s1 = inlined_call_operand.vmem [shape: f32[1,4,1], index: 1, kind: input, shape index: {}]
  %s2 = inlined_call_operand.vmem [shape: f32[1,4,1], index: 2, kind: input, shape index: {}]
  %s3 = inlined_call_operand.hbm [shape: f32[2,4,16], index: 3, kind: output, shape index: {}]
  %s4 = sld [smem:[#allocation0]]
  $region45: #{tpu_custom_call.1} parent=0
    _
  %s6 = ssub.s32 1, %s4
  %s7 = scalar_select 0, %s6, %s4
  $region1: #{tpu_custom_call.1} parent=0
    #allocation2 [shape = 'u8[4096]{0}', space=vmem, size = 0x1000, scoped, tag = 'output window, operand 0']
    #allocation3 [shape = 's32[2]{0}', space=sflag, size = 0x8, scoped, tag = 'scoped memory for tpu_custom_call.1']
    %8 = vsyncpa [#allocation3], 0
    %s9 = scalar_lea.sflag [#allocation3], 1
    %10 = vsyncpa %s9, 0
    loop: start=0, step=1, limit=4
    $region2: #{tpu_custom_call.1} parent=1 // loop_pre_header
      _
    $region3: #{tpu_custom_call.1} parent=1 // loop_header
      %s12 = sphi 0, %s16
      %p13 = scmp.ge.s32.totalorder %s12, 4
      %s19 = sphi 0, %s31
      %s20 = sphi 0, %s27
      %s21 = sphi 0, %s19
      %s22 = sphi 0, %s20
      %s23 = sphi 0, %s21
      %s24 = sphi 0, %s22
      %s36 = sphi 0, %s38
      %s39 = sphi 0, %s36
      %s40 = sphi 0, %s39
      %s56 = sphi 0, %s40
      %s60 = sphi 0, %s60
      %s62 = sphi 0, %s60
      %s63 = sphi 0, %s62
      %s77 = sphi 0, %s63
      %s81 = sphi 0, %s81
      %s83 = sphi 0, %s81
      %s84 = sphi 0, %s83
      %s98 = sphi 0, %s84
      %s106 = sphi 0, %s108
      %s109 = sphi 0, %s106
      %s110 = sphi 0, %s109
      %s126 = sphi 0, %s110
    $region4: #{tpu_custom_call.1} parent=1 // loop_header_branch
      %15 = sbr.rel (%p13) target = $region8
    $region5: #{tpu_custom_call.1} parent=1 // loop_body
      %s17 = ssub.s32 %s12, 1
      %s18 = ssub.s32 %s12, 2
      %s25 = sadd.s32 1, %s20
      %p26 = scmp.ge.s32.totalorder %s25, 1
      %s27 = scalar_select %p26, 0, %s25
      %s28 = sadd.s32 1, %s19
      %s29 = scalar_select %p26, %s28, %s19
      %p30 = scmp.ge.s32.totalorder %s29, 2
      %s31 = scalar_select %p30, 0, %s29
      %s32 = ssub.s32 %s19, %s31
      %s33 = ssub.s32 %s20, %s27
      %s34 = sor.u32 %s32, %s33
      %p35 = scmp.eq.s32.totalorder %s34, 0
      %s37 = sadd.s32 %s36, 1
      %s38 = scalar_select %p35, %s36, %s37
      %p41 = pneg %p35
      %p42 = scmp.eq.s32.totalorder %s12, 1
      %p43 = por %p41, %p42
      %p44 = scmp.ne.s32.totalorder %s36, %s39
      %p45 = scmp.eq.s32.totalorder %s12, 0
      %p46 = por %p44, %p45
      %p47 = scmp.ne.s32.totalorder %s36, %s39
      %p48 = scmp.eq.s32.totalorder %s17, 1
      %p49 = por %p47, %p48
      %p50 = scmp.ne.s32.totalorder %s39, %s40
      %p51 = scmp.eq.s32.totalorder %s17, 0
      %p52 = por %p50, %p51
      %p53 = scmp.ne.s32.totalorder %s39, %s40
      %p54 = scmp.eq.s32.totalorder %s18, 1
      %p55 = por %p53, %p54
      %p57 = scmp.ne.s32.totalorder %s40, %s56
      %p58 = scmp.eq.s32.totalorder %s18, 0
      %p59 = por %p57, %p58
      %s61 = sadd.s32 %s60, 1
      %p64 = scmp.eq.s32.totalorder %s12, 1
      %p65 = scmp.ne.s32.totalorder %s60, %s62
      %p66 = scmp.eq.s32.totalorder %s12, 0
      %p67 = por %p65, %p66
      %p68 = scmp.ne.s32.totalorder %s60, %s62
      %p69 = scmp.eq.s32.totalorder %s17, 1
      %p70 = por %p68, %p69
      %p71 = scmp.ne.s32.totalorder %s62, %s63
      %p72 = scmp.eq.s32.totalorder %s17, 0
      %p73 = por %p71, %p72
      %p74 = scmp.ne.s32.totalorder %s62, %s63
      %p75 = scmp.eq.s32.totalorder %s18, 1
      %p76 = por %p74, %p75
      %p78 = scmp.ne.s32.totalorder %s63, %s77
      %p79 = scmp.eq.s32.totalorder %s18, 0
      %p80 = por %p78, %p79
      %s82 = sadd.s32 %s81, 1
      %p85 = scmp.eq.s32.totalorder %s12, 1
      %p86 = scmp.ne.s32.totalorder %s81, %s83
      %p87 = scmp.eq.s32.totalorder %s12, 0
      %p88 = por %p86, %p87
      %p89 = scmp.ne.s32.totalorder %s81, %s83
      %p90 = scmp.eq.s32.totalorder %s17, 1
      %p91 = por %p89, %p90
      %p92 = scmp.ne.s32.totalorder %s83, %s84
      %p93 = scmp.eq.s32.totalorder %s17, 0
      %p94 = por %p92, %p93
      %p95 = scmp.ne.s32.totalorder %s83, %s84
      %p96 = scmp.eq.s32.totalorder %s18, 1
      %p97 = por %p95, %p96
      %p99 = scmp.ne.s32.totalorder %s84, %s98
      %p100 = scmp.eq.s32.totalorder %s18, 0
      %p101 = por %p99, %p100
      %s102 = ssub.s32 %s19, %s31
      %s103 = ssub.s32 %s20, %s27
      %s104 = sor.u32 %s102, %s103
      %p105 = scmp.eq.s32.totalorder %s104, 0
      %s107 = sadd.s32 %s106, 1
      %s108 = scalar_select %p105, %s106, %s107
      %p111 = pneg %p105
      %p112 = scmp.eq.s32.totalorder %s12, 1
      %p113 = por %p111, %p112
      %p114 = scmp.ne.s32.totalorder %s106, %s109
      %p115 = scmp.eq.s32.totalorder %s12, 0
      %p116 = por %p114, %p115
      %p117 = scmp.ne.s32.totalorder %s106, %s109
      %p118 = scmp.eq.s32.totalorder %s17, 1
      %p119 = por %p117, %p118
      %p120 = scmp.ne.s32.totalorder %s109, %s110
      %p121 = scmp.eq.s32.totalorder %s17, 0
      %p122 = por %p120, %p121
      %p123 = scmp.ne.s32.totalorder %s109, %s110
      %p124 = scmp.eq.s32.totalorder %s18, 1
      %p125 = por %p123, %p124
      %p127 = scmp.ne.s32.totalorder %s110, %s126
      %p128 = scmp.eq.s32.totalorder %s18, 0
      %p129 = por %p127, %p128
      %p130 = scmp.le.s32.totalorder 1, %s12
      %p131 = scmp.lt.s32.totalorder %s12, 3
      %p132 = pnand %p130, %p131
      %p133 = pneg %p132
      // Predicated region
      $region9: #{tpu_custom_call.1} parent=5 // pred_check
        _
      $region10: #{tpu_custom_call.1} parent=5 // pred_check_branch
        %135 = sbr.rel (%p132) target = $region12
      $region11: #{tpu_custom_call.1} parent=5 // pred_region
        %s136 = ssub.s32 %s12, 1
        // Predicated region
        $region13: #{tpu_custom_call.1} parent=11 // pred_check
          %p137 = pneg %p73
        $region14: #{tpu_custom_call.1} parent=11 // pred_check_branch
          %139 = sbr.rel (%p137) target = $region16
        $region15: #{tpu_custom_call.1} parent=11 // pred_region
          _
        $region16: #{tpu_custom_call.1} parent=11 // pred_fallthru
          _
        // Predicated region
        $region17: #{tpu_custom_call.1} parent=11 // pred_check
          %p140 = pneg %p94
        $region18: #{tpu_custom_call.1} parent=11 // pred_check_branch
          %142 = sbr.rel (%p140) target = $region20
        $region19: #{tpu_custom_call.1} parent=11 // pred_region
          _
        $region20: #{tpu_custom_call.1} parent=11 // pred_fallthru
          _
      $region12: #{tpu_custom_call.1} parent=5 // pred_fallthru
        _
      %p143 = scmp.lt.s32.totalorder %s12, 2
      // Predicated region
      $region21: #{tpu_custom_call.1} parent=5 // pred_check
        %p144 = pneg %p143
      $region22: #{tpu_custom_call.1} parent=5 // pred_check_branch
        %146 = sbr.rel (%p144) target = $region24
      $region23: #{tpu_custom_call.1} parent=5 // pred_region
        // Predicated region
        $region25: #{tpu_custom_call.1} parent=23 // pred_check
          %p147 = pneg %p46
        $region26: #{tpu_custom_call.1} parent=23 // pred_check_branch
          %149 = sbr.rel (%p147) target = $region28
        $region27: #{tpu_custom_call.1} parent=23 // pred_region
          %p150 = scmp.lt.s32.totalorder %s19, 1
          %s151 = scalar_select %p150, %s19, 1
          %p152 = scmp.lt.s32.totalorder %s20, 0
          %s153 = scalar_select %p152, %s20, 0
          %s154 = sadd.s32 %s153, %s151
          %s155 = smul.addr %s154, 4
          %s156 = scalar_lea.vmem %s0, %s155
        $region28: #{tpu_custom_call.1} parent=23 // pred_fallthru
          _
      $region24: #{tpu_custom_call.1} parent=5 // pred_fallthru
        _
      %p157 = scmp.le.s32.totalorder 1, %s12
      %p158 = scmp.lt.s32.totalorder %s12, 3
      %p159 = pnand %p157, %p158
      %p160 = pneg %p159
      // Predicated region
      $region29: #{tpu_custom_call.1} parent=5 // pred_check
        _
      $region30: #{tpu_custom_call.1} parent=5 // pred_check_branch
        %162 = sbr.rel (%p159) target = $region32
      $region31: #{tpu_custom_call.1} parent=5 // pred_region
        %s163 = ssub.s32 %s12, 1
        %p164 = scmp.lt.s32.totalorder %s21, 1
        %s165 = scalar_select %p164, %s21, 1
        %p166 = scmp.lt.s32.totalorder %s22, 0
        %s167 = scalar_select %p166, %s22, 0
        %s168 = sadd.s32 %s167, %s165
        %s169 = smul.addr %s168, 4
        %s170 = scalar_lea.vmem %s0, %s169
        %p171 = pneg %p52
        %p172 = pneg %p49
        %p173 = pneg %p73
        %p174 = pneg %p70
        %p175 = pneg %p94
        %p176 = pneg %p91
        %p177 = pneg %p122
        %p178 = pneg %p119
        %s179 = sand.u32 %s109, 1
        %s180 = scalar_lea.sflag [#allocation3], %s179
        %s181 = sand.u32 %s109, 1
        %s182 = smul.addr %s181, 4
        %s183 = scalar_lea.vmem [#allocation2], %s182
        %p184 = scmp.lt.s32.totalorder %s21, 1
        %s185 = scalar_select %p184, %s21, 1
        %p186 = scmp.lt.s32.totalorder %s22, 0
        %s187 = scalar_select %p186, %s22, 0
        %s188 = sadd.s32 %s187, %s185
        %s189 = smul.addr %s188, 4
        %s190 = scalar_lea.vmem %s0, %s189
        %v191 = vld [vmem:[%s190] sm:$0xf]
        %vm192 = vcmask 125952
        %v193 = vsel %vm192, %v191, 0.0
        %v194 = vrot.slane %v193, 4
        %v195 = vadd.f32 %v193, %v194
        %v196 = vrot.slane %v195, 2
        %v197 = vadd.f32 %v195, %v196
        %v198 = vrot.slane %v197, 1
        %v199 = vadd.f32 %v197, %v198
        %v200 = vrcp.pop 4.0
        %v201 = vmul.f32 4.0, %v200
        %v202 = vsub.f32 1.0, %v201
        %v203 = vmul.f32 %v200, %v202
        %v204 = vadd.f32 %v200, %v203
        %vm205 = vweird.f32 %v200
        %v206 = vsel %vm205, %v200, %v204
        %v207 = vmul.f32 %v199, %v206
        %v208 = vsub.f32 %v191, %v207
        %v209 = vmul.f32 %v208, %v208
        %v210 = vsel %vm192, %v209, 0.0
        %v211 = vrot.slane %v210, 4
        %v212 = vadd.f32 %v210, %v211
        %v213 = vrot.slane %v212, 2
        %v214 = vadd.f32 %v212, %v213
        %v215 = vrot.slane %v214, 1
        %v216 = vadd.f32 %v214, %v215
        %v217 = vmul.f32 %v216, %v206
        %v218 = vadd.f32 %v217, 1e-05
        %v219 = vrsqrt.pop %v218
        %v220 = vmul.f32 %v219, %v218
        %v221 = vmul.f32 %v220, %v219
        %v222 = vmul.f32 0.5, %v221
        %v223 = vsub.f32 1.5, %v222
        %v224 = vmul.f32 %v219, %v223
        %vm225 = vweird.f32 %v218
        %vm226 = vweird.f32 %v219
        %vm227 = vmor %vm225, %vm226
        %v228 = vsel %vm227, %v219, %v224
        %v229 = vmul.f32 %v208, %v228
        %v230 = vld [vmem:[%s1] sm:$0xf]
        %232 = vset.pattern.permute.xlu0 0
        %233 = vperm.xlu0 %232, %v230
        %v234 = vpop.permute.xlu0 %233
        %v236 = vmul.f32 %v229, %v234
        %v237 = vld [vmem:[%s2] sm:$0xf]
        %239 = vset.pattern.permute.xlu0 0
        %240 = vperm.xlu0 %239, %v237
        %v241 = vpop.permute.xlu0 %240
        %v243 = vadd.f32 %v236, %v241
        %244 = vst.msk [vmem:[%s183] sm:$0xf] %vm192, %v243
        %s245 = sand.u32 %s109, 1
        %s246 = scalar_lea.sflag [#allocation3], %s245
        %s247 = sand.u32 %s109, 1
        %s248 = smul.addr %s247, 4
        %s249 = scalar_lea.vmem [#allocation2], %s248
        // Predicated region
        $region33: #{tpu_custom_call.1} parent=31 // pred_check
          %p250 = pneg %p119
        $region34: #{tpu_custom_call.1} parent=31 // pred_check_branch
          %252 = sbr.rel (%p250) target = $region36
        $region35: #{tpu_custom_call.1} parent=31 // pred_region
          %254 = vsyncadd %s246, 0
          %s255 = sadd.s32 %s22, %s21
          %s256 = smul.addr %s255, 4
          %s257 = scalar_lea.hbm %s3, %s256
          %s259 = sshll.u32 %s249, 4
          %s260 = int_to_ptr.vmem [resolvable:$true] %s259
          %s261 = sshll.u32 %s257, 4
          %s262 = int_to_ptr.hbm [resolvable:$true] %s261
          %264 = dma.vmem_to_hbm [thread:$0]  %s260, 64, %s262, %s246
        $region36: #{tpu_custom_call.1} parent=31 // pred_fallthru
          _
      $region32: #{tpu_custom_call.1} parent=5 // pred_fallthru
        _
      %p265 = scmp.le.s32.totalorder 2, %s12
      // Predicated region
      $region37: #{tpu_custom_call.1} parent=5 // pred_check
        %p266 = pneg %p265
      $region38: #{tpu_custom_call.1} parent=5 // pred_check_branch
        %268 = sbr.rel (%p266) target = $region40
      $region39: #{tpu_custom_call.1} parent=5 // pred_region
        %s269 = ssub.s32 %s12, 2
        // Predicated region
        $region41: #{tpu_custom_call.1} parent=39 // pred_check
          %p270 = pneg %p125
        $region42: #{tpu_custom_call.1} parent=39 // pred_check_branch
          %272 = sbr.rel (%p270) target = $region44
        $region43: #{tpu_custom_call.1} parent=39 // pred_region
          %s273 = sand.u32 %s110, 1
          %s274 = scalar_lea.sflag [#allocation3], %s273
          %s275 = sand.u32 %s110, 1
          %s276 = smul.addr %s275, 4
          %s277 = scalar_lea.vmem [#allocation2], %s276
          %279 = dma.done %s274, 64
        $region44: #{tpu_custom_call.1} parent=39 // pred_fallthru
          _
      $region40: #{tpu_custom_call.1} parent=5 // pred_fallthru
        _
    $region6: #{tpu_custom_call.1} parent=1 // loop_footer
      %s16 = sadd.s32 1, %s12
    $region7: #{tpu_custom_call.1} parent=1 // loop_footer_branch
      %11 = sbr.rel target = $region3
    $region8: #{tpu_custom_call.1} parent=1 // loop_exit
      _
    %280 = vsyncpa [#allocation3], 1
    %s281 = scalar_lea.sflag [#allocation3], 1
    %282 = vsyncpa %s281, 1

</llo_original>
